<compile_context>
chip_gen: v7x
topology: tpu7x:2x2x1
jax: 0.10.0
libtpu: 0.0.40
codegen_flags: <defaults>
</compile_context>

<pallas_src>
import functools

import jax
import jax.numpy as jnp
import numpy as np
from jax import lax
from jax.experimental import pallas as pl
from jax.experimental.pallas import tpu as pltpu


def _loss_kernel(
    anchor_hbm,      # (A_pad, D) bf16 in HBM (pl.ANY) — copied once at k == 0
    cand_ref,        # (tC, D)    bf16 streamed candidate block
    out_ref,         # (1, 1)     f32 loss
    a_buf_ref,       # (A_pad, D) bf16 scratch: scale * normalized anchor
    a_rows_ref,      # (B, D)     bf16 scratch: rows [:B] of a_buf
    m_ref,           # (1, B)     f32 running max    (forward online LSE)
    l_ref,           # (1, B)     f32 running sumexp (forward online LSE)
    bwd_ref,         # (1, 1)     f32 backward-CE sum minus 2 * sum(diag)
    *,
    batch: int,
    num_anchor: int,
    scale: float,
):
    k = pl.program_id(0)
    nk = pl.num_programs(0)
    B = batch

    # Per-block candidate inverse norms only (no (tC, D) normalized copy).
    # Elementwise / EUP work stays in f32 (v5e has no bf16 VPU/EUP).
    c = cand_ref[...]                                          # (tC, D) bf16
    c32 = c.astype(jnp.float32)
    c_ss = jnp.sum(c32 * c32, axis=1, keepdims=True)           # (tC, 1)
    inv_c = lax.rsqrt(jnp.maximum(c_ss, 1e-24))                # (tC, 1)

    @pl.when(k == 0)
    def _init():
        # One-time anchor copy: single VMEM buffer, no BlockSpec double-buffer.
        pltpu.sync_copy(anchor_hbm, a_buf_ref)
        a32 = a_buf_ref[...].astype(jnp.float32)               # (A_pad, D)
        a_ss = jnp.sum(a32 * a32, axis=1, keepdims=True)       # (A_pad, 1)
        # Fold `* scale` into the anchor's rsqrt normalization factor.
        afac = scale * lax.rsqrt(jnp.maximum(a_ss, 1e-24))     # (A_pad, 1)
        a_buf_ref[...] = (a32 * afac).astype(jnp.bfloat16)     # in-place scaled
        a_rows_bf = a_buf_ref[0:B, :]                          # (B, D) bf16
        a_rows_ref[...] = a_rows_bf

        # Backward CE logits: bwd[i, j] = scores[j, i], shape (B, A_pad).
        c0 = c[0:B, :]                                         # (B, D) bf16
        inv_c0 = inv_c[0:B, :]                                 # (B, 1)
        bwd = lax.dot_general(
            c0, a_buf_ref[...],
            dimension_numbers=(((1,), (1,)), ((), ())),
            preferred_element_type=jnp.float32,
        ) * inv_c0                                             # (B, A_pad)
        if num_anchor < bwd.shape[1]:
            # Mask the padded (zero) anchor columns out of the backward LSE.
            col = lax.broadcasted_iota(jnp.int32, bwd.shape, 1)
            bwd = jnp.where(col < num_anchor, bwd, -jnp.inf)
        bmax = jnp.max(bwd, axis=1, keepdims=True)             # (B, 1)
        blse = bmax + jnp.log(
            jnp.sum(jnp.exp(bwd - bmax), axis=1, keepdims=True))  # (B, 1)

        # Diagonal targets scores[i, i]: row-wise dot, no B^2 mask.
        diag = jnp.sum(
            a_rows_bf.astype(jnp.float32) * c0.astype(jnp.float32),
            axis=1, keepdims=True) * inv_c0                    # (B, 1)

        # Both CE branches subtract sum(diag); fold everything scalar here so
        # the forward/backward stats never need a layout change.
        bwd_ref[...] = jnp.sum(blse - 2.0 * diag, axis=0, keepdims=True)

        # Init forward online-logsumexp accumulators.
        m_ref[...] = jnp.full_like(m_ref, -jnp.inf)
        l_ref[...] = jnp.zeros_like(l_ref)

    # Forward CE over streamed candidate blocks (online logsumexp).
    # Score tile is scores[:B, block].T of shape (tC, B): raw bf16 candidates
    # feed the MXU directly and inv_c is applied as a natural sublane
    # broadcast on the (tC, B) tile (B*tC multiplies instead of tC*D).
    s = lax.dot_general(
        c, a_rows_ref[...],
        dimension_numbers=(((1,), (1,)), ((), ())),
        preferred_element_type=jnp.float32,
    ) * inv_c                                                  # (tC, B)
    m_new = jnp.maximum(m_ref[...], jnp.max(s, axis=0, keepdims=True))  # (1, B)
    l_ref[...] = (l_ref[...] * jnp.exp(m_ref[...] - m_new)
                  + jnp.sum(jnp.exp(s - m_new), axis=0, keepdims=True))
    m_ref[...] = m_new

    @pl.when(k == nk - 1)
    def _finalize():
        fwd_lse = m_ref[...] + jnp.log(l_ref[...])             # (1, B)
        fwd_sum = jnp.sum(fwd_lse, axis=1, keepdims=True)      # (1, 1)
        # Each CE loss is a mean over B rows; final loss is their average.
        out_ref[...] = (fwd_sum + bwd_ref[...]) / (2.0 * B)


def _default_candidate_block_rows(num_candidates: int, batch: int,
                                  target: int = 512) -> int:
    """Largest candidate tile <= target rows that divides C and covers the
    first `batch` rows; prefers multiples of 256 (v6e/v7x MXU), then 128
    (v5e), so the MXU N dimension is fully populated."""
    if num_candidates <= target:
        return num_candidates
    cands = [m * batch for m in range(1, target // batch + 1)
             if num_candidates % (m * batch) == 0]
    if not cands:
        return num_candidates
    for align in (256, 128, 1):
        aligned = [t for t in cands if t % align == 0]
        if aligned:
            return max(aligned)
    return max(cands)


def bidirectional_hard_negatives_ranking_loss(
    reps,
    scale: float = 20.0,
    num_hard_negatives_query: int = 0,
    candidate_block_rows: int | None = None,
):
    """reps: list of (B, D) embedding arrays (one per sentence-feature group)."""
    anchor = jnp.concatenate(reps[: num_hard_negatives_query + 1], axis=0)
    candidates = jnp.concatenate(reps[num_hard_negatives_query + 1:], axis=0)
    B, D = reps[0].shape
    A = anchor.shape[0]
    C = candidates.shape[0]

    # bf16 stream: halves HBM traffic on the dominant candidate stream and
    # uses the native bf16 MXU path; all LSE / accumulator math stays in f32.
    anchor_bf = anchor.astype(jnp.bfloat16)
    cand_bf = candidates.astype(jnp.bfloat16)

    # Pad anchor rows to a lane multiple so the (B, A) backward tile is
    # lane-dense; padded columns are masked to -inf inside the kernel.
    A_pad = ((A + 127) // 128) * 128
    if A_pad != A:
        anchor_bf = jnp.pad(anchor_bf, ((0, A_pad - A), (0, 0)))

    tc = (candidate_block_rows if candidate_block_rows is not None
          else _default_candidate_block_rows(C, B))
    # Block 0 must cover the first B candidate rows (diag targets + backward
    # CE logits), and the candidate axis must tile evenly.
    if C % tc != 0 or tc < B:
        raise ValueError("candidate_block_rows must divide C and be >= batch")
    if B % 8 != 0 or tc % 8 != 0 or D % 128 != 0:
        raise ValueError("shapes must respect the (8, 128) TPU tiling")
    num_blocks = C // tc

    # VMEM budget from the actual footprint instead of a hard-coded limit:
    # bf16 candidate double buffers + single anchor copy + anchor rows + slack,
    # with headroom, capped by the device capacity (v7x has only 64 MiB).
    bytes_bf16 = 2
    required = (2 * tc * D * bytes_bf16        # candidate stream double buffers
                + A_pad * D * bytes_bf16       # anchor scratch (single copy)
                + B * D * bytes_bf16           # scale-normalized anchor rows
                + (1 << 20))                   # stats / compiler slack
    try:
        vmem_cap = pltpu.get_tpu_info().vmem_capacity_bytes
    except Exception:
        vmem_cap = 128 * 1024 * 1024
    vmem_limit = max(32 << 20,
                     min(int(required * 1.5) + (2 << 20), int(vmem_cap * 0.85)))

    kernel = functools.partial(
        _loss_kernel, batch=B, num_anchor=A, scale=float(scale))
    out = pl.pallas_call(
        kernel,
        out_shape=jax.ShapeDtypeStruct((1, 1), jnp.float32),
        grid_spec=pltpu.PrefetchScalarGridSpec(
            num_scalar_prefetch=0,
            grid=(num_blocks,),
            in_specs=[
                pl.BlockSpec(memory_space=pl.ANY),          # anchor: stays in HBM
                pl.BlockSpec((tc, D), lambda k: (k, 0)),    # candidates: streamed
            ],
            out_specs=pl.BlockSpec((1, 1), lambda k: (0, 0)),
            scratch_shapes=[
                pltpu.VMEM((A_pad, D), jnp.bfloat16),  # anchor copy (one buffer)
                pltpu.VMEM((B, D), jnp.bfloat16),      # scale-normalized rows [:B]
                pltpu.VMEM((1, B), jnp.float32),       # running max
                pltpu.VMEM((1, B), jnp.float32),       # running sum-exp
                pltpu.VMEM((1, 1), jnp.float32),       # bwd-CE sum - 2*diag sum
            ],
        ),
        compiler_params=pltpu.CompilerParams(
            # Online-LSE reduction over candidate blocks -> "arbitrary".
            dimension_semantics=("arbitrary",),
            vmem_limit_bytes=vmem_limit,
        ),
    )(anchor_bf, cand_bf)
    return out[0, 0]


def _reference_loss(reps, scale, num_hard_negatives_query):
    """Pure-JAX reference mirroring the PyTorch forward."""
    anchor = jnp.concatenate(reps[: num_hard_negatives_query + 1], axis=0)
    candidates = jnp.concatenate(reps[num_hard_negatives_query + 1:], axis=0)
    B = reps[0].shape[0]
    a_n = anchor / jnp.maximum(
        jnp.linalg.norm(anchor, axis=1, keepdims=True), 1e-12)
    c_n = candidates / jnp.maximum(
        jnp.linalg.norm(candidates, axis=1, keepdims=True), 1e-12)
    scores = (a_n @ c_n.T) * scale
    labels = jnp.arange(B)

    def ce(logits, labels):
        lse = jax.scipy.special.logsumexp(logits, axis=1)
        tgt = logits[jnp.arange(logits.shape[0]), labels]
        return jnp.mean(lse - tgt)

    forward_loss = ce(scores[:B, :], labels)
    backward_loss = ce(scores[:, :B].T, labels)
    return (forward_loss + backward_loss) / 2.0


if __name__ == "__main__":
    # Small synthetic setup:
    #   batch B = 16, hidden D = 256
    #   num_hard_negatives_query Q = 1 -> anchor = 2 groups   (A = 32)
    #   candidate groups = 4 (positive + 3 hard negatives)    (C = 64)
    # candidate_block_rows=32 is passed explicitly so the grid streams two
    # candidate blocks and exercises the online-LSE accumulation path.
    B, D = 16, 256
    Q = 1
    n_candidate_groups = 4
    n_groups = (Q + 1) + n_candidate_groups

    key = jax.random.PRNGKey(0)
    keys = jax.random.split(key, n_groups)
    reps = [jax.random.normal(k, (B, D), dtype=jnp.float32) for k in keys]

    loss = bidirectional_hard_negatives_ranking_loss(
        reps, scale=20.0, num_hard_negatives_query=Q, candidate_block_rows=32)
    loss = jax.block_until_ready(loss)

    # Reference on bf16-rounded inputs (the kernel streams bf16 MXU operands
    # while keeping all accumulation / LSE math in f32).
    reps_bf = [r.astype(jnp.bfloat16).astype(jnp.float32) for r in reps]
    ref = jax.block_until_ready(_reference_loss(reps_bf, 20.0, Q))
    if not np.allclose(np.asarray(loss), np.asarray(ref), rtol=2e-2, atol=2e-2):
        raise AssertionError(f"mismatch: pallas={loss} ref={ref}")

    print("KERNEL_OK")
</pallas_src>

<mosaic_0001>
module attributes {stable_mosaic.version = 11 : i64} {
  func.func @_loss_kernel(%arg0: i32, %arg1: memref<128x256xbf16, #tpu.memory_space<any>>, %arg2: memref<32x256xbf16, #tpu.memory_space<vmem>>, %arg3: memref<1x1xf32, #tpu.memory_space<vmem>>, %arg4: memref<128x256xbf16, #tpu.memory_space<vmem>>, %arg5: memref<16x256xbf16, #tpu.memory_space<vmem>>, %arg6: memref<1x16xf32, #tpu.memory_space<vmem>>, %arg7: memref<1x16xf32, #tpu.memory_space<vmem>>, %arg8: memref<1x1xf32, #tpu.memory_space<vmem>>) attributes {dimension_semantics = [#tpu.dimension_semantics<arbitrary>], iteration_bounds = array<i64: 2>, scalar_prefetch = 0 : i64, scratch_operands = 5 : i64, tpu.core_type = #tpu.core_type<tc>, window_params = [{}, {transform_indices = @transform_1, window_bounds = array<i64: 32, 256>}, {pipeline_mode = #tpu.pipeline_mode<synchronous>, transform_indices = @transform_2, window_bounds = array<i64: 1, 1>}]} {
    %c0 = arith.constant 0 : index
    %c0_0 = arith.constant 0 : index
    %0 = vector.load %arg2[%c0, %c0_0] : memref<32x256xbf16, #tpu.memory_space<vmem>>, vector<32x256xbf16>
    %1 = arith.extf %0 : vector<32x256xbf16> to vector<32x256xf32>
    %2 = arith.mulf %1, %1 : vector<32x256xf32>
    %cst = arith.constant dense<0.000000e+00> : vector<32xf32>
    %3 = vector.multi_reduction <add>, %2, %cst [1] : vector<32x256xf32> to vector<32xf32>
    %4 = vector.shape_cast %3 : vector<32xf32> to vector<32x1xf32>
    %cst_1 = arith.constant 1.000000e-24 : f32
    %5 = vector.broadcast %cst_1 : f32 to vector<32x1xf32>
    %6 = arith.maximumf %4, %5 : vector<32x1xf32>
    %7 = math.rsqrt %6 : vector<32x1xf32>
    %c0_i32 = arith.constant 0 : i32
    %8 = arith.cmpi eq, %arg0, %c0_i32 : i32
    %9 = arith.extui %8 : i1 to i32
    %c0_i32_2 = arith.constant 0 : i32
    %10 = arith.cmpi ne, %9, %c0_i32_2 : i32
    scf.if %10 {
      "tpu.region"() ({
        %87 = tpu.sem_alloc : memref<!tpu.dma_semaphore, #tpu.memory_space<semaphore_mem>>
        tpu.enqueue_dma source(%arg1 : memref<128x256xbf16, #tpu.memory_space<any>>) target(%arg4 : memref<128x256xbf16, #tpu.memory_space<vmem>>) target_semaphore(%87 : memref<!tpu.dma_semaphore, #tpu.memory_space<semaphore_mem>>)
        tpu.wait_dma2 semaphore(%87 : memref<!tpu.dma_semaphore, #tpu.memory_space<semaphore_mem>>) src(%arg1 : memref<128x256xbf16, #tpu.memory_space<any>>) dst(%arg4 : memref<128x256xbf16, #tpu.memory_space<vmem>>)
        tpu.yield
      }) : () -> ()
      %c0_19 = arith.constant 0 : index
      %c0_20 = arith.constant 0 : index
      %35 = vector.load %arg4[%c0_19, %c0_20] : memref<128x256xbf16, #tpu.memory_space<vmem>>, vector<128x256xbf16>
      %36 = arith.extf %35 : vector<128x256xbf16> to vector<128x256xf32>
      %37 = arith.mulf %36, %36 : vector<128x256xf32>
      %cst_21 = arith.constant dense<0.000000e+00> : vector<128xf32>
      %38 = vector.multi_reduction <add>, %37, %cst_21 [1] : vector<128x256xf32> to vector<128xf32>
      %39 = vector.shape_cast %38 : vector<128xf32> to vector<128x1xf32>
      %cst_22 = arith.constant 1.000000e-24 : f32
      %40 = vector.broadcast %cst_22 : f32 to vector<128x1xf32>
      %41 = arith.maximumf %39, %40 : vector<128x1xf32>
      %42 = math.rsqrt %41 : vector<128x1xf32>
      %cst_23 = arith.constant 2.000000e+01 : f32
      %43 = vector.broadcast %cst_23 : f32 to vector<128x1xf32>
      %44 = arith.mulf %43, %42 : vector<128x1xf32>
      %45 = vector.broadcast %44 : vector<128x1xf32> to vector<128x256xf32>
      %46 = arith.mulf %36, %45 : vector<128x256xf32>
      %47 = arith.truncf %46 : vector<128x256xf32> to vector<128x256xbf16>
      %c0_24 = arith.constant 0 : index
      %c0_25 = arith.constant 0 : index
      %48 = vector.load %arg4[%c0_24, %c0_25] : memref<128x256xbf16, #tpu.memory_space<vmem>>, vector<128x256xbf16>
      tpu.vector_store %arg4[%c0_24, %c0_25], %47 {strides = array<i32>} : memref<128x256xbf16, #tpu.memory_space<vmem>>, vector<128x256xbf16>,
      %c0_26 = arith.constant 0 : index
      %c0_27 = arith.constant 0 : index
      %49 = vector.load %arg4[%c0_26, %c0_27] : memref<128x256xbf16, #tpu.memory_space<vmem>>, vector<16x256xbf16>
      %c0_28 = arith.constant 0 : index
      %c0_29 = arith.constant 0 : index
      %50 = vector.load %arg5[%c0_28, %c0_29] : memref<16x256xbf16, #tpu.memory_space<vmem>>, vector<16x256xbf16>
      tpu.vector_store %arg5[%c0_28, %c0_29], %49 {strides = array<i32>} : memref<16x256xbf16, #tpu.memory_space<vmem>>, vector<16x256xbf16>,
      %51 = vector.extract_strided_slice %0 {offsets = [0, 0], sizes = [16, 256], strides = [1, 1]} : vector<32x256xbf16> to vector<16x256xbf16>
      %52 = vector.extract_strided_slice %7 {offsets = [0, 0], sizes = [16, 1], strides = [1, 1]} : vector<32x1xf32> to vector<16x1xf32>
      %c0_30 = arith.constant 0 : index
      %c0_31 = arith.constant 0 : index
      %53 = vector.load %arg4[%c0_30, %c0_31] : memref<128x256xbf16, #tpu.memory_space<vmem>>, vector<128x256xbf16>
      %cst_32 = arith.constant dense<0.000000e+00> : vector<16x128xf32>
      %54 = tpu.matmul %51, %53, %cst_32 {dimension_numbers = #tpu.dot_dimension_numbers<[1], [1], [0], [0], [0, 0, 1, 0], [], []>} : vector<16x256xbf16>, vector<128x256xbf16>, vector<16x128xf32> -> vector<16x128xf32>
      %55 = vector.broadcast %52 : vector<16x1xf32> to vector<16x128xf32>
      %56 = arith.mulf %54, %55 : vector<16x128xf32>
      %57 = tpu.iota {dimensions = array<i32: 1>} : vector<16x128xi32>
      %c32_i32 = arith.constant 32 : i32
      %58 = vector.broadcast %c32_i32 : i32 to vector<16x128xi32>
      %59 = arith.cmpi slt, %57, %58 : vector<16x128xi32>
      %cst_33 = arith.constant 0xFF800000 : f32
      %60 = vector.broadcast %cst_33 : f32 to vector<16x128xf32>
      %61 = arith.select %59, %56, %60 : vector<16x128xi1>, vector<16x128xf32>
      %cst_34 = arith.constant dense<0xFF800000> : vector<16xf32>
      %62 = vector.multi_reduction <maximumf>, %61, %cst_34 [1] : vector<16x128xf32> to vector<16xf32>
      %63 = vector.shape_cast %62 : vector<16xf32> to vector<16x1xf32>
      %64 = vector.broadcast %63 : vector<16x1xf32> to vector<16x128xf32>
      %65 = arith.subf %61, %64 : vector<16x128xf32>
      %66 = math.exp %65 : vector<16x128xf32>
      %cst_35 = arith.constant dense<0.000000e+00> : vector<16xf32>
      %67 = vector.multi_reduction <add>, %66, %cst_35 [1] : vector<16x128xf32> to vector<16xf32>
      %68 = vector.shape_cast %67 : vector<16xf32> to vector<16x1xf32>
      %69 = math.log %68 : vector<16x1xf32>
      %70 = arith.addf %63, %69 : vector<16x1xf32>
      %71 = arith.extf %49 : vector<16x256xbf16> to vector<16x256xf32>
      %72 = arith.extf %51 : vector<16x256xbf16> to vector<16x256xf32>
      %73 = arith.mulf %71, %72 : vector<16x256xf32>
      %cst_36 = arith.constant dense<0.000000e+00> : vector<16xf32>
      %74 = vector.multi_reduction <add>, %73, %cst_36 [1] : vector<16x256xf32> to vector<16xf32>
      %75 = vector.shape_cast %74 : vector<16xf32> to vector<16x1xf32>
      %76 = arith.mulf %75, %52 : vector<16x1xf32>
      %cst_37 = arith.constant 2.000000e+00 : f32
      %77 = vector.broadcast %cst_37 : f32 to vector<16x1xf32>
      %78 = arith.mulf %77, %76 : vector<16x1xf32>
      %79 = arith.subf %70, %78 : vector<16x1xf32>
      %cst_38 = arith.constant dense<0.000000e+00> : vector<1xf32>
      %80 = vector.multi_reduction <add>, %79, %cst_38 [0] : vector<16x1xf32> to vector<1xf32>
      %81 = vector.shape_cast %80 : vector<1xf32> to vector<1x1xf32>
      %c0_39 = arith.constant 0 : index
      %c0_40 = arith.constant 0 : index
      %82 = vector.load %arg8[%c0_39, %c0_40] : memref<1x1xf32, #tpu.memory_space<vmem>>, vector<1x1xf32>
      tpu.vector_store %arg8[%c0_39, %c0_40], %81 {strides = array<i32>} : memref<1x1xf32, #tpu.memory_space<vmem>>, vector<1x1xf32>,
      %cst_41 = arith.constant 0xFF800000 : f32
      %83 = vector.broadcast %cst_41 : f32 to vector<1x16xf32>
      %c0_42 = arith.constant 0 : index
      %c0_43 = arith.constant 0 : index
      %84 = vector.load %arg6[%c0_42, %c0_43] : memref<1x16xf32, #tpu.memory_space<vmem>>, vector<1x16xf32>
      tpu.vector_store %arg6[%c0_42, %c0_43], %83 {strides = array<i32>} : memref<1x16xf32, #tpu.memory_space<vmem>>, vector<1x16xf32>,
      %cst_44 = arith.constant 0.000000e+00 : f32
      %85 = vector.broadcast %cst_44 : f32 to vector<1x16xf32>
      %c0_45 = arith.constant 0 : index
      %c0_46 = arith.constant 0 : index
      %86 = vector.load %arg7[%c0_45, %c0_46] : memref<1x16xf32, #tpu.memory_space<vmem>>, vector<1x16xf32>
      tpu.vector_store %arg7[%c0_45, %c0_46], %85 {strides = array<i32>} : memref<1x16xf32, #tpu.memory_space<vmem>>, vector<1x16xf32>,
    } else {
    }
    %c0_3 = arith.constant 0 : index
    %c0_4 = arith.constant 0 : index
    %11 = vector.load %arg5[%c0_3, %c0_4] : memref<16x256xbf16, #tpu.memory_space<vmem>>, vector<16x256xbf16>
    %cst_5 = arith.constant dense<0.000000e+00> : vector<32x16xf32>
    %12 = tpu.matmul %0, %11, %cst_5 {dimension_numbers = #tpu.dot_dimension_numbers<[1], [1], [0], [0], [0, 0, 1, 0], [], []>} : vector<32x256xbf16>, vector<16x256xbf16>, vector<32x16xf32> -> vector<32x16xf32>
    %13 = vector.broadcast %7 : vector<32x1xf32> to vector<32x16xf32>
    %14 = arith.mulf %12, %13 : vector<32x16xf32>
    %c0_6 = arith.constant 0 : index
    %c0_7 = arith.constant 0 : index
    %15 = vector.load %arg6[%c0_6, %c0_7] : memref<1x16xf32, #tpu.memory_space<vmem>>, vector<1x16xf32>
    %cst_8 = arith.constant dense<0xFF800000> : vector<16xf32>
    %16 = vector.multi_reduction <maximumf>, %14, %cst_8 [0] : vector<32x16xf32> to vector<16xf32>
    %17 = vector.shape_cast %16 : vector<16xf32> to vector<1x16xf32>
    %18 = arith.maximumf %15, %17 : vector<1x16xf32>
    %c0_9 = arith.constant 0 : index
    %c0_10 = arith.constant 0 : index
    %19 = vector.load %arg7[%c0_9, %c0_10] : memref<1x16xf32, #tpu.memory_space<vmem>>, vector<1x16xf32>
    %c0_11 = arith.constant 0 : index
    %c0_12 = arith.constant 0 : index
    %20 = vector.load %arg6[%c0_11, %c0_12] : memref<1x16xf32, #tpu.memory_space<vmem>>, vector<1x16xf32>
    %21 = arith.subf %20, %18 : vector<1x16xf32>
    %22 = math.exp %21 : vector<1x16xf32>
    %23 = arith.mulf %19, %22 : vector<1x16xf32>
    %24 = vector.broadcast %18 : vector<1x16xf32> to vector<32x16xf32>
    %25 = arith.subf %14, %24 : vector<32x16xf32>
    %26 = math.exp %25 : vector<32x16xf32>
    %cst_13 = arith.constant dense<0.000000e+00> : vector<16xf32>
    %27 = vector.multi_reduction <add>, %26, %cst_13 [0] : vector<32x16xf32> to vector<16xf32>
    %28 = vector.shape_cast %27 : vector<16xf32> to vector<1x16xf32>
    %29 = arith.addf %23, %28 : vector<1x16xf32>
    %c0_14 = arith.constant 0 : index
    %c0_15 = arith.constant 0 : index
    %30 = vector.load %arg7[%c0_14, %c0_15] : memref<1x16xf32, #tpu.memory_space<vmem>>, vector<1x16xf32>
    tpu.vector_store %arg7[%c0_14, %c0_15], %29 {strides = array<i32>} : memref<1x16xf32, #tpu.memory_space<vmem>>, vector<1x16xf32>,
    %c0_16 = arith.constant 0 : index
    %c0_17 = arith.constant 0 : index
    %31 = vector.load %arg6[%c0_16, %c0_17] : memref<1x16xf32, #tpu.memory_space<vmem>>, vector<1x16xf32>
    tpu.vector_store %arg6[%c0_16, %c0_17], %18 {strides = array<i32>} : memref<1x16xf32, #tpu.memory_space<vmem>>, vector<1x16xf32>,
    %c1_i32 = arith.constant 1 : i32
    %32 = arith.cmpi eq, %arg0, %c1_i32 : i32
    %33 = arith.extui %32 : i1 to i32
    %c0_i32_18 = arith.constant 0 : i32
    %34 = arith.cmpi ne, %33, %c0_i32_18 : i32
    scf.if %34 {
      %c0_19 = arith.constant 0 : index
      %c0_20 = arith.constant 0 : index
      %35 = vector.load %arg6[%c0_19, %c0_20] : memref<1x16xf32, #tpu.memory_space<vmem>>, vector<1x16xf32>
      %c0_21 = arith.constant 0 : index
      %c0_22 = arith.constant 0 : index
      %36 = vector.load %arg7[%c0_21, %c0_22] : memref<1x16xf32, #tpu.memory_space<vmem>>, vector<1x16xf32>
      %37 = math.log %36 : vector<1x16xf32>
      %38 = arith.addf %35, %37 : vector<1x16xf32>
      %cst_23 = arith.constant dense<0.000000e+00> : vector<1xf32>
      %39 = vector.multi_reduction <add>, %38, %cst_23 [1] : vector<1x16xf32> to vector<1xf32>
      %40 = vector.shape_cast %39 : vector<1xf32> to vector<1x1xf32>
      %c0_24 = arith.constant 0 : index
      %c0_25 = arith.constant 0 : index
      %41 = vector.load %arg8[%c0_24, %c0_25] : memref<1x1xf32, #tpu.memory_space<vmem>>, vector<1x1xf32>
      %42 = arith.addf %40, %41 : vector<1x1xf32>
      %cst_26 = arith.constant 3.200000e+01 : f32
      %43 = vector.broadcast %cst_26 : f32 to vector<1x1xf32>
      %44 = arith.divf %42, %43 : vector<1x1xf32>
      %c0_27 = arith.constant 0 : index
      %c0_28 = arith.constant 0 : index
      %45 = vector.load %arg3[%c0_27, %c0_28] : memref<1x1xf32, #tpu.memory_space<vmem>>, vector<1x1xf32>
      tpu.vector_store %arg3[%c0_27, %c0_28], %44 {strides = array<i32>} : memref<1x1xf32, #tpu.memory_space<vmem>>, vector<1x1xf32>,
    } else {
    }
    return
  }
  func.func @transform_1(%arg0: i32) -> (i32, i32) {
    %c0_i32 = arith.constant 0 : i32
    %c0_i32_0 = arith.constant 0 : i32
    return %arg0, %c0_i32 : i32, i32
  }
  func.func @transform_2(%arg0: i32) -> (i32, i32) {
    %c0_i32 = arith.constant 0 : i32
    %c0_i32_0 = arith.constant 0 : i32
    %c0_i32_1 = arith.constant 0 : i32
    return %c0_i32, %c0_i32_0 : i32, i32
  }
}

</mosaic_0001>

<llo_original>
// kernel: tpu_custom_call.1
$region0: #{tpu_custom_call.1}
  #allocation0 [shape = 'u32[]', space=smem, size = 0x4, offset = 0x4, fixed_abs, tag = 'smem constant byte address 0x4 - core index']
  #allocation1 [shape = 'u32[144,128]{1,0:T(1,128)}', space=vmem, size = 0x12000, scoped, tag = 'internal scratch']
  #allocation2 [shape = 'bf16[128,256]{1,0:T(16,128)(2,1)}', space=vmem, size = 0x10000, scoped, tag = 'scratch operand']
  #allocation3 [shape = 'bf16[16,256]{1,0:T(16,128)(2,1)}', space=vmem, size = 0x2000, scoped, tag = 'scratch operand']
  #allocation4 [shape = 'f32[1,16]{1,0:T(1,128)}', space=vmem, size = 0x200, scoped, tag = 'scratch operand']
  #allocation5 [shape = 'f32[1,16]{1,0:T(1,128)}', space=vmem, size = 0x200, scoped, tag = 'scratch operand']
  #allocation6 [shape = 'f32[1,1]{1,0:T(1,128)}', space=vmem, size = 0x200, scoped, tag = 'scratch operand']
  #allocation12 [shape = 's32[]', space=sflag, size = 0x4, offset = 0, fixed_abs, tag = 'sflag constant byte address 0x0 - dummy sync flag']
  %s0 = inlined_call_operand.hbm [shape: bf16[128,256], index: 0, kind: input, shape index: {}]
  %s1 = inlined_call_operand.hbm [shape: bf16[64,256], index: 1, kind: input, shape index: {}]
  %s2 = inlined_call_operand.hbm [shape: f32[1,1], index: 2, kind: output, shape index: {}]
  %s3 = sld [smem:[#allocation0]]
  $region50: #{tpu_custom_call.1} parent=0
    _
  %s5 = ssub.s32 1, %s3
  %s6 = scalar_select 0, %s5, %s3
  $region1: #{tpu_custom_call.1} parent=0
    #allocation7 [shape = 'u8[32768]{0}', space=vmem, size = 0x8000, scoped, tag = 'input window, operand 1']
    #allocation8 [shape = 's32[2]{0}', space=sflag, size = 0x8, scoped, tag = 'scoped memory for tpu_custom_call.1']
    #allocation9 [shape = 's32[2]{0}', space=sflag, size = 0x8, scoped, tag = 'scoped memory for tpu_custom_call.1']
    #allocation10 [shape = 'u8[512]{0}', space=vmem, size = 0x400, scoped, tag = 'output window, operand 0, single buffered']
    %7 = vsyncpa [#allocation8], 0
    %s8 = scalar_lea.sflag [#allocation8], 1
    %9 = vsyncpa %s8, 0
    %10 = vsyncpa [#allocation9], 0
    loop: start=0, step=1, limit=4
    $region2: #{tpu_custom_call.1} parent=1 // loop_pre_header
      _
    $region3: #{tpu_custom_call.1} parent=1 // loop_header
      %s12 = sphi 0, %s16
      %p13 = scmp.ge.s32.totalorder %s12, 4
      %s22 = sphi 0, %s24
      %s25 = sphi 0, %s22
      %s26 = sphi 0, %s25
      %s42 = sphi 0, %s26
      %s46 = sphi 0, %s46
      %s48 = sphi 0, %s46
      %s49 = sphi 0, %s48
      %s63 = sphi 0, %s49
    $region4: #{tpu_custom_call.1} parent=1 // loop_header_branch
      %15 = sbr.rel (%p13) target = $region8
    $region5: #{tpu_custom_call.1} parent=1 // loop_body
      %s17 = ssub.s32 %s12, 1
      %s18 = ssub.s32 %s12, 2
      %s19 = sadd.s32 %s12, 1
      %s20 = ssub.s32 %s12, %s19
      %p21 = scmp.eq.s32.totalorder %s20, 0
      %s23 = sadd.s32 %s22, 1
      %s24 = scalar_select %p21, %s22, %s23
      %p27 = pneg %p21
      %p28 = scmp.eq.s32.totalorder %s12, 1
      %p29 = por %p27, %p28
      %p30 = scmp.ne.s32.totalorder %s22, %s25
      %p31 = scmp.eq.s32.totalorder %s12, 0
      %p32 = por %p30, %p31
      %p33 = scmp.ne.s32.totalorder %s22, %s25
      %p34 = scmp.eq.s32.totalorder %s17, 1
      %p35 = por %p33, %p34
      %p36 = scmp.ne.s32.totalorder %s25, %s26
      %p37 = scmp.eq.s32.totalorder %s17, 0
      %p38 = por %p36, %p37
      %p39 = scmp.ne.s32.totalorder %s25, %s26
      %p40 = scmp.eq.s32.totalorder %s18, 1
      %p41 = por %p39, %p40
      %p43 = scmp.ne.s32.totalorder %s26, %s42
      %p44 = scmp.eq.s32.totalorder %s18, 0
      %p45 = por %p43, %p44
      %s47 = sadd.s32 %s46, 1
      %p50 = scmp.eq.s32.totalorder %s12, 1
      %p51 = scmp.ne.s32.totalorder %s46, %s48
      %p52 = scmp.eq.s32.totalorder %s12, 0
      %p53 = por %p51, %p52
      %p54 = scmp.ne.s32.totalorder %s46, %s48
      %p55 = scmp.eq.s32.totalorder %s17, 1
      %p56 = por %p54, %p55
      %p57 = scmp.ne.s32.totalorder %s48, %s49
      %p58 = scmp.eq.s32.totalorder %s17, 0
      %p59 = por %p57, %p58
      %p60 = scmp.ne.s32.totalorder %s48, %s49
      %p61 = scmp.eq.s32.totalorder %s18, 1
      %p62 = por %p60, %p61
      %p64 = scmp.ne.s32.totalorder %s49, %s63
      %p65 = scmp.eq.s32.totalorder %s18, 0
      %p66 = por %p64, %p65
      %p67 = scmp.le.s32.totalorder 1, %s12
      %p68 = scmp.lt.s32.totalorder %s12, 3
      %p69 = pnand %p67, %p68
      %p70 = pneg %p69
      // Predicated region
      $region9: #{tpu_custom_call.1} parent=5 // pred_check
        _
      $region10: #{tpu_custom_call.1} parent=5 // pred_check_branch
        %72 = sbr.rel (%p69) target = $region12
      $region11: #{tpu_custom_call.1} parent=5 // pred_region
        %s73 = ssub.s32 %s12, 1
      $region12: #{tpu_custom_call.1} parent=5 // pred_fallthru
        _
      %p74 = scmp.lt.s32.totalorder %s12, 2
      // Predicated region
      $region13: #{tpu_custom_call.1} parent=5 // pred_check
        %p75 = pneg %p74
      $region14: #{tpu_custom_call.1} parent=5 // pred_check_branch
        %77 = sbr.rel (%p75) target = $region16
      $region15: #{tpu_custom_call.1} parent=5 // pred_region
        // Predicated region
        $region17: #{tpu_custom_call.1} parent=15 // pred_check
          %p78 = pneg %p32
        $region18: #{tpu_custom_call.1} parent=15 // pred_check_branch
          %80 = sbr.rel (%p78) target = $region20
        $region19: #{tpu_custom_call.1} parent=15 // pred_region
          %s81 = sand.u32 %s22, 1
          %s82 = scalar_lea.sflag [#allocation8], %s81
          %s83 = sand.u32 %s22, 1
          %s84 = smul.addr %s83, 32
          %s85 = scalar_lea.vmem [#allocation7], %s84
          %s86 = smul.u32 4, %s12
          %s88 = ssub.s32 512, 512
          %89 = vsyncadd %s82, %s88
          %s90 = smul.addr %s86, 2
          %s91 = smul.addr %s90, 64
          %s92 = scalar_lea.hbm %s1, %s91
          %s93 = sshll.u32 %s85, 4
          %s94 = int_to_ptr.vmem [resolvable:$true] %s93
          %99 = dma.hbm_to_vmem [thread:$0]  %s92, 512, %s94, %s82, 128, 128, 8
        $region20: #{tpu_custom_call.1} parent=15 // pred_fallthru
          _
      $region16: #{tpu_custom_call.1} parent=5 // pred_fallthru
        _
      %p100 = scmp.le.s32.totalorder 1, %s12
      %p101 = scmp.lt.s32.totalorder %s12, 3
      %p102 = pnand %p100, %p101
      %p103 = pneg %p102
      // Predicated region
      $region21: #{tpu_custom_call.1} parent=5 // pred_check
        _
      $region22: #{tpu_custom_call.1} parent=5 // pred_check_branch
        %105 = sbr.rel (%p102) target = $region24
      $region23: #{tpu_custom_call.1} parent=5 // pred_region
        %s106 = ssub.s32 %s12, 1
        %s107 = sand.u32 %s25, 1
        %s108 = scalar_lea.sflag [#allocation8], %s107
        %s109 = sand.u32 %s25, 1
        %s110 = smul.addr %s109, 32
        %s111 = scalar_lea.vmem [#allocation7], %s110
        // Predicated region
        $region25: #{tpu_custom_call.1} parent=23 // pred_check
          %p112 = pneg %p38
        $region26: #{tpu_custom_call.1} parent=23 // pred_check_branch
          %114 = sbr.rel (%p112) target = $region28
        $region27: #{tpu_custom_call.1} parent=23 // pred_region
          %115 = dma.done %s108, 512
        $region28: #{tpu_custom_call.1} parent=23 // pred_fallthru
          _
        %s116 = sand.u32 %s25, 1
        %s117 = scalar_lea.sflag [#allocation8], %s116
        %s118 = sand.u32 %s25, 1
        %s119 = smul.addr %s118, 32
        %s120 = scalar_lea.vmem [#allocation7], %s119
        %p121 = pneg %p38
        %p122 = pneg %p35
        %p123 = pneg %p59
        %p124 = pneg %p56
        %s125 = smul.u32 4, %s17
        %v127 = vld [vmem:[%s111] sm:$0xff]
        %v128 = vld [vmem:[%s111 + $0x8] sm:$0xff]
        %v129 = vld [vmem:[%s111 + $0x10] sm:$0xff]
        %v130 = vld [vmem:[%s111 + $0x18] sm:$0xff]
        %v131 = vunpack.c.l.bf16 %v127
        %v132 = vunpack.c.h.bf16 %v127
        %v133 = vunpack.c.l.bf16 %v128
        %v134 = vunpack.c.h.bf16 %v128
        %v135 = vunpack.c.l.bf16 %v129
        %v136 = vunpack.c.h.bf16 %v129
        %v137 = vunpack.c.l.bf16 %v130
        %v138 = vunpack.c.h.bf16 %v130
        %v139 = vmul.f32 %v131, %v131
        %v140 = vmul.f32 %v132, %v132
        %v141 = vmul.f32 %v133, %v133
        %v142 = vmul.f32 %v134, %v134
        %v143 = vmul.f32 %v135, %v135
        %v144 = vmul.f32 %v136, %v136
        %v145 = vmul.f32 %v137, %v137
        %v146 = vmul.f32 %v138, %v138
        %v147 = vadd.f32 %v139, %v140
        %148 = vadd.xlane.f32.xlu0 %v147
        %v149 = vpop.xlane.xlu0 %148
        %v150 = vadd.f32 %v141, %v142
        %151 = vadd.xlane.f32.xlu0 %v150
        %v152 = vpop.xlane.xlu0 %151
        %v153 = vadd.f32 %v143, %v144
        %154 = vadd.xlane.f32.xlu0 %v153
        %v155 = vpop.xlane.xlu0 %154
        %v156 = vadd.f32 %v145, %v146
        %157 = vadd.xlane.f32.xlu0 %v156
        %v158 = vpop.xlane.xlu0 %157
        %v159 = vmax.f32 %v149, 1e-24
        %v160 = vmax.f32 %v152, 1e-24
        %v161 = vmax.f32 %v155, 1e-24
        %v162 = vmax.f32 %v158, 1e-24
        %v163 = vrsqrt.pop %v159
        %v164 = vrsqrt.pop %v160
        %v165 = vrsqrt.pop %v161
        %v166 = vrsqrt.pop %v162
        %p167 = scmp.eq.s32.totalorder %s17, 0
        // Predicated region
        $region29: #{tpu_custom_call.1} parent=23 // pred_check
          %p168 = pneg %p167
        $region30: #{tpu_custom_call.1} parent=23 // pred_check_branch
          %170 = sbr.rel (%p168) target = $region32
        $region31: #{tpu_custom_call.1} parent=23 // pred_region
          $region33: #{tpu_custom_call.1} parent=31
            #allocation11 [shape = 's32[1]{0}', space=sflag, size = 0x4, scoped, tag = 'scoped memory for tpu_custom_call.1']
            #allocation13 [shape = 'u32[9]{0}', space=smem, size = 0x24, scoped, tag = 'DMA stride descriptor']
            %s172 = sshll.u32 1, 14
            %s173 = sxor.u32 4294967295, %s172
            %s175 = sld [smem:[#allocation0]]
            %s176 = sadd.s32 2, %s175
            %s178 = sshll.u32 7, 26
            %s179 = sxor.u32 4294967295, %s178
            %s180 = sand.u32 0, %s179
            %s181 = sshll.u32 %s176, 26
            %s182 = sor.u32 %s180, %s181
            %s183 = sshll.u32 [#allocation2], 4
            %s184 = int_to_ptr.vmem [resolvable:$true] %s183
            %187 = sst [smem:[#allocation13]] 256
            %s188 = scalar_lea.smem [#allocation13], 1
            %189 = sst [smem:[%s188]] 256
            %s190 = scalar_lea.smem [#allocation13], 2
            %191 = sst [smem:[%s190]] 2
            %s192 = scalar_lea.smem [#allocation13], 3
            %193 = sst [smem:[%s192]] 64
            %s194 = scalar_lea.smem [#allocation13], 4
            %195 = sst [smem:[%s194]] 128
            %s196 = scalar_lea.smem [#allocation13], 5
            %197 = sst [smem:[%s196]] 2
            %s198 = scalar_lea.smem [#allocation13], 6
            %199 = sst [smem:[%s198]] 128
            %s200 = scalar_lea.smem [#allocation13], 7
            %201 = sst [smem:[%s200]] 64
            %s202 = scalar_lea.smem [#allocation13], 8
            %203 = sst [smem:[%s202]] 4
            %205 = dma.general %s0, 2048, %s184, [#allocation11], [#allocation12], [#allocation13], %s182, 0
            %s206 = smul.u32 4, 16
            %s207 = smul.u32 %s206, 2
            %s208 = sshll.u32 %s207, 4
            %209 = dma.done [#allocation11], %s208
          %v210 = vld [vmem:[#allocation2] sm:$0xff]
          %v211 = vld [vmem:[#allocation2 + $0x8] sm:$0xff]
          %v212 = vld [vmem:[#allocation2 + $0x10] sm:$0xff]
          %v213 = vld [vmem:[#allocation2 + $0x18] sm:$0xff]
          %v214 = vld [vmem:[#allocation2 + $0x20] sm:$0xff]
          %v215 = vld [vmem:[#allocation2 + $0x28] sm:$0xff]
          %v216 = vld [vmem:[#allocation2 + $0x30] sm:$0xff]
          %v217 = vld [vmem:[#allocation2 + $0x38] sm:$0xff]
          %v218 = vld [vmem:[#allocation2 + $0x40] sm:$0xff]
          %v219 = vld [vmem:[#allocation2 + $0x48] sm:$0xff]
          %v220 = vld [vmem:[#allocation2 + $0x50] sm:$0xff]
          %v221 = vld [vmem:[#allocation2 + $0x58] sm:$0xff]
          %v222 = vld [vmem:[#allocation2 + $0x60] sm:$0xff]
          %v223 = vld [vmem:[#allocation2 + $0x68] sm:$0xff]
          %v224 = vld [vmem:[#allocation2 + $0x70] sm:$0xff]
          %v225 = vld [vmem:[#allocation2 + $0x78] sm:$0xff]
          %v226 = vunpack.c.l.bf16 %v210
          %v227 = vunpack.c.l.bf16 %v211
          %v228 = vunpack.c.h.bf16 %v210
          %v229 = vunpack.c.h.bf16 %v211
          %v230 = vunpack.c.l.bf16 %v212
          %v231 = vunpack.c.l.bf16 %v213
          %v232 = vunpack.c.h.bf16 %v212
          %v233 = vunpack.c.h.bf16 %v213
          %v234 = vunpack.c.l.bf16 %v214
          %v235 = vunpack.c.l.bf16 %v215
          %v236 = vunpack.c.h.bf16 %v214
          %v237 = vunpack.c.h.bf16 %v215
          %v238 = vunpack.c.l.bf16 %v216
          %v239 = vunpack.c.l.bf16 %v217
          %v240 = vunpack.c.h.bf16 %v216
          %v241 = vunpack.c.h.bf16 %v217
          %v242 = vunpack.c.l.bf16 %v218
          %v243 = vunpack.c.l.bf16 %v219
          %v244 = vunpack.c.h.bf16 %v218
          %v245 = vunpack.c.h.bf16 %v219
          %v246 = vunpack.c.l.bf16 %v220
          %v247 = vunpack.c.l.bf16 %v221
          %v248 = vunpack.c.h.bf16 %v220
          %v249 = vunpack.c.h.bf16 %v221
          %v250 = vunpack.c.l.bf16 %v222
          %v251 = vunpack.c.l.bf16 %v223
          %v252 = vunpack.c.h.bf16 %v222
          %v253 = vunpack.c.h.bf16 %v223
          %v254 = vunpack.c.l.bf16 %v224
          %v255 = vunpack.c.l.bf16 %v225
          %v256 = vunpack.c.h.bf16 %v224
          %v257 = vunpack.c.h.bf16 %v225
          %v258 = vmul.f32 %v226, %v226
          %v259 = vmul.f32 %v227, %v227
          %v260 = vmul.f32 %v228, %v228
          %v261 = vmul.f32 %v229, %v229
          %v262 = vmul.f32 %v230, %v230
          %v263 = vmul.f32 %v231, %v231
          %v264 = vmul.f32 %v232, %v232
          %v265 = vmul.f32 %v233, %v233
          %v266 = vmul.f32 %v234, %v234
          %v267 = vmul.f32 %v235, %v235
          %v268 = vmul.f32 %v236, %v236
          %v269 = vmul.f32 %v237, %v237
          %v270 = vmul.f32 %v238, %v238
          %v271 = vmul.f32 %v239, %v239
          %v272 = vmul.f32 %v240, %v240
          %v273 = vmul.f32 %v241, %v241
          %v274 = vmul.f32 %v242, %v242
          %v275 = vmul.f32 %v243, %v243
          %v276 = vmul.f32 %v244, %v244
          %v277 = vmul.f32 %v245, %v245
          %v278 = vmul.f32 %v246, %v246
          %v279 = vmul.f32 %v247, %v247
          %v280 = vmul.f32 %v248, %v248
          %v281 = vmul.f32 %v249, %v249
          %v282 = vmul.f32 %v250, %v250
          %v283 = vmul.f32 %v251, %v251
          %v284 = vmul.f32 %v252, %v252
          %v285 = vmul.f32 %v253, %v253
          %v286 = vmul.f32 %v254, %v254
          %v287 = vmul.f32 %v255, %v255
          %v288 = vmul.f32 %v256, %v256
          %v289 = vmul.f32 %v257, %v257
          %v290 = vadd.f32 %v258, %v259
          %291 = vadd.xlane.f32.xlu0 %v290
          %v292 = vpop.xlane.xlu0 %291
          %v293 = vadd.f32 %v260, %v261
          %294 = vadd.xlane.f32.xlu0 %v293
          %v295 = vpop.xlane.xlu0 %294
          %v296 = vadd.f32 %v262, %v263
          %297 = vadd.xlane.f32.xlu0 %v296
          %v298 = vpop.xlane.xlu0 %297
          %v299 = vadd.f32 %v264, %v265
          %300 = vadd.xlane.f32.xlu0 %v299
          %v301 = vpop.xlane.xlu0 %300
          %v302 = vadd.f32 %v266, %v267
          %303 = vadd.xlane.f32.xlu0 %v302
          %v304 = vpop.xlane.xlu0 %303
          %v305 = vadd.f32 %v268, %v269
          %306 = vadd.xlane.f32.xlu0 %v305
          %v307 = vpop.xlane.xlu0 %306
          %v308 = vadd.f32 %v270, %v271
          %309 = vadd.xlane.f32.xlu0 %v308
          %v310 = vpop.xlane.xlu0 %309
          %v311 = vadd.f32 %v272, %v273
          %312 = vadd.xlane.f32.xlu0 %v311
          %v313 = vpop.xlane.xlu0 %312
          %v314 = vadd.f32 %v274, %v275
          %315 = vadd.xlane.f32.xlu0 %v314
          %v316 = vpop.xlane.xlu0 %315
          %v317 = vadd.f32 %v276, %v277
          %318 = vadd.xlane.f32.xlu0 %v317
          %v319 = vpop.xlane.xlu0 %318
          %v320 = vadd.f32 %v278, %v279
          %321 = vadd.xlane.f32.xlu0 %v320
          %v322 = vpop.xlane.xlu0 %321
          %v323 = vadd.f32 %v280, %v281
          %324 = vadd.xlane.f32.xlu0 %v323
          %v325 = vpop.xlane.xlu0 %324
          %v326 = vadd.f32 %v282, %v283
          %327 = vadd.xlane.f32.xlu0 %v326
          %v328 = vpop.xlane.xlu0 %327
          %v329 = vadd.f32 %v284, %v285
          %330 = vadd.xlane.f32.xlu0 %v329
          %v331 = vpop.xlane.xlu0 %330
          %v332 = vadd.f32 %v286, %v287
          %333 = vadd.xlane.f32.xlu0 %v332
          %v334 = vpop.xlane.xlu0 %333
          %v335 = vadd.f32 %v288, %v289
          %336 = vadd.xlane.f32.xlu0 %v335
          %v337 = vpop.xlane.xlu0 %336
          %v338 = vmax.f32 %v292, 1e-24
          %v339 = vmax.f32 %v295, 1e-24
          %v340 = vmax.f32 %v298, 1e-24
          %v341 = vmax.f32 %v301, 1e-24
          %v342 = vmax.f32 %v304, 1e-24
          %v343 = vmax.f32 %v307, 1e-24
          %v344 = vmax.f32 %v310, 1e-24
          %v345 = vmax.f32 %v313, 1e-24
          %v346 = vmax.f32 %v316, 1e-24
          %v347 = vmax.f32 %v319, 1e-24
          %v348 = vmax.f32 %v322, 1e-24
          %v349 = vmax.f32 %v325, 1e-24
          %v350 = vmax.f32 %v328, 1e-24
          %v351 = vmax.f32 %v331, 1e-24
          %v352 = vmax.f32 %v334, 1e-24
          %v353 = vmax.f32 %v337, 1e-24
          %v354 = vrsqrt.pop %v338
          %v355 = vrsqrt.pop %v339
          %v356 = vrsqrt.pop %v340
          %v357 = vrsqrt.pop %v341
          %v358 = vrsqrt.pop %v342
          %v359 = vrsqrt.pop %v343
          %v360 = vrsqrt.pop %v344
          %v361 = vrsqrt.pop %v345
          %v362 = vrsqrt.pop %v346
          %v363 = vrsqrt.pop %v347
          %v364 = vrsqrt.pop %v348
          %v365 = vrsqrt.pop %v349
          %v366 = vrsqrt.pop %v350
          %v367 = vrsqrt.pop %v351
          %v368 = vrsqrt.pop %v352
          %v369 = vrsqrt.pop %v353
          %v370 = vmul.f32 %v354, 20.0
          %v371 = vmul.f32 %v355, 20.0
          %v372 = vmul.f32 %v356, 20.0
          %v373 = vmul.f32 %v357, 20.0
          %v374 = vmul.f32 %v358, 20.0
          %v375 = vmul.f32 %v359, 20.0
          %v376 = vmul.f32 %v360, 20.0
          %v377 = vmul.f32 %v361, 20.0
          %v378 = vmul.f32 %v362, 20.0
          %v379 = vmul.f32 %v363, 20.0
          %v380 = vmul.f32 %v364, 20.0
          %v381 = vmul.f32 %v365, 20.0
          %v382 = vmul.f32 %v366, 20.0
          %v383 = vmul.f32 %v367, 20.0
          %v384 = vmul.f32 %v368, 20.0
          %v385 = vmul.f32 %v369, 20.0
          %v386 = vmul.f32 %v226, %v370
          %v387 = vmul.f32 %v227, %v370
          %v388 = vmul.f32 %v228, %v371
          %v389 = vmul.f32 %v229, %v371
          %v390 = vmul.f32 %v230, %v372
          %v391 = vmul.f32 %v231, %v372
          %v392 = vmul.f32 %v232, %v373
          %v393 = vmul.f32 %v233, %v373
          %v394 = vmul.f32 %v234, %v374
          %v395 = vmul.f32 %v235, %v374
          %v396 = vmul.f32 %v236, %v375
          %v397 = vmul.f32 %v237, %v375
          %v398 = vmul.f32 %v238, %v376
          %v399 = vmul.f32 %v239, %v376
          %v400 = vmul.f32 %v240, %v377
          %v401 = vmul.f32 %v241, %v377
          %v402 = vmul.f32 %v242, %v378
          %v403 = vmul.f32 %v243, %v378
          %v404 = vmul.f32 %v244, %v379
          %v405 = vmul.f32 %v245, %v379
          %v406 = vmul.f32 %v246, %v380
          %v407 = vmul.f32 %v247, %v380
          %v408 = vmul.f32 %v248, %v381
          %v409 = vmul.f32 %v249, %v381
          %v410 = vmul.f32 %v250, %v382
          %v411 = vmul.f32 %v251, %v382
          %v412 = vmul.f32 %v252, %v383
          %v413 = vmul.f32 %v253, %v383
          %v414 = vmul.f32 %v254, %v384
          %v415 = vmul.f32 %v255, %v384
          %v416 = vmul.f32 %v256, %v385
          %v417 = vmul.f32 %v257, %v385
          %v418 = vpack.c.bf16 %v388, %v386
          %v419 = vpack.c.bf16 %v389, %v387
          %v420 = vpack.c.bf16 %v392, %v390
          %v421 = vpack.c.bf16 %v393, %v391
          %v422 = vpack.c.bf16 %v396, %v394
          %v423 = vpack.c.bf16 %v397, %v395
          %v424 = vpack.c.bf16 %v400, %v398
          %v425 = vpack.c.bf16 %v401, %v399
          %v426 = vpack.c.bf16 %v404, %v402
          %v427 = vpack.c.bf16 %v405, %v403
          %v428 = vpack.c.bf16 %v408, %v406
          %v429 = vpack.c.bf16 %v409, %v407
          %v430 = vpack.c.bf16 %v412, %v410
          %v431 = vpack.c.bf16 %v413, %v411
          %v432 = vpack.c.bf16 %v416, %v414
          %v433 = vpack.c.bf16 %v417, %v415
          %434 = vst [vmem:[#allocation2] sm:$0xff] %v418
          %435 = vst [vmem:[#allocation2 + $0x8] sm:$0xff] %v419
          %436 = vst [vmem:[#allocation2 + $0x10] sm:$0xff] %v420
          %437 = vst [vmem:[#allocation2 + $0x18] sm:$0xff] %v421
          %438 = vst [vmem:[#allocation2 + $0x20] sm:$0xff] %v422
          %439 = vst [vmem:[#allocation2 + $0x28] sm:$0xff] %v423
          %440 = vst [vmem:[#allocation2 + $0x30] sm:$0xff] %v424
          %441 = vst [vmem:[#allocation2 + $0x38] sm:$0xff] %v425
          %442 = vst [vmem:[#allocation2 + $0x40] sm:$0xff] %v426
          %443 = vst [vmem:[#allocation2 + $0x48] sm:$0xff] %v427
          %444 = vst [vmem:[#allocation2 + $0x50] sm:$0xff] %v428
          %445 = vst [vmem:[#allocation2 + $0x58] sm:$0xff] %v429
          %446 = vst [vmem:[#allocation2 + $0x60] sm:$0xff] %v430
          %447 = vst [vmem:[#allocation2 + $0x68] sm:$0xff] %v431
          %448 = vst [vmem:[#allocation2 + $0x70] sm:$0xff] %v432
          %449 = vst [vmem:[#allocation2 + $0x78] sm:$0xff] %v433
          %v450 = vld [vmem:[#allocation2] sm:$0xff]
          %v451 = vld [vmem:[#allocation2 + $0x8] sm:$0xff]
          %452 = vst [vmem:[#allocation3] sm:$0xff] %v450
          %453 = vst [vmem:[#allocation3 + $0x8] sm:$0xff] %v451
          %v454 = vld [vmem:[#allocation2] sm:$0xff]
          %v455 = vld [vmem:[#allocation2 + $0x8] sm:$0xff]
          %v456 = vld [vmem:[#allocation2 + $0x10] sm:$0xff]
          %v457 = vld [vmem:[#allocation2 + $0x18] sm:$0xff]
          %v458 = vld [vmem:[#allocation2 + $0x20] sm:$0xff]
          %v459 = vld [vmem:[#allocation2 + $0x28] sm:$0xff]
          %v460 = vld [vmem:[#allocation2 + $0x30] sm:$0xff]
          %v461 = vld [vmem:[#allocation2 + $0x38] sm:$0xff]
          %v462 = vld [vmem:[#allocation2 + $0x40] sm:$0xff]
          %v463 = vld [vmem:[#allocation2 + $0x48] sm:$0xff]
          %v464 = vld [vmem:[#allocation2 + $0x50] sm:$0xff]
          %v465 = vld [vmem:[#allocation2 + $0x58] sm:$0xff]
          %v466 = vld [vmem:[#allocation2 + $0x60] sm:$0xff]
          %v467 = vld [vmem:[#allocation2 + $0x68] sm:$0xff]
          %v468 = vld [vmem:[#allocation2 + $0x70] sm:$0xff]
          %v469 = vld [vmem:[#allocation2 + $0x78] sm:$0xff]
          %v472 = vunpack.c.l.b16 %v127
          %v473 = vunpack.c.h.b16 %v127
          %v474 = vunpack.c.l.b16 %v128
          %v475 = vunpack.c.h.b16 %v128
          %v476 = vpack.c.b16 %v474, %v472
          %v477 = vpack.c.b16 %v475, %v473
          %480 = vmatprep.subr.bf16.mxu0 %v455
          %481 = vmatpush1.bf16.xpose.msra.mxu0 %v454
          %482 = vmatprep.subr.bf16.mxu0 %v457
          %483 = vmatpush1.bf16.xpose.msra.mxu0 %v456
          %484 = vmatprep.subr.bf16.mxu0 %v459
          %485 = vmatpush1.bf16.xpose.msra.mxu0 %v458
          %486 = vmatprep.subr.bf16.mxu0 %v461
          %487 = vmatpush1.bf16.xpose.msra.mxu0 %v460
          %488 = vmatprep.subr.bf16.mxu0 %v463
          %489 = vmatpush1.bf16.xpose.msra.mxu0 %v462
          %490 = vmatprep.subr.bf16.mxu0 %v465
          %491 = vmatpush1.bf16.xpose.msra.mxu0 %v464
          %492 = vmatprep.subr.bf16.mxu0 %v467
          %493 = vmatpush1.bf16.xpose.msra.mxu0 %v466
          %494 = vmatprep.subr.bf16.mxu0 %v469
          %495 = vmatpush1.bf16.xpose.msra.mxu0 %v468
          %496 = vmatprep.subr.bf16.mxu0 0
          %497 = vmatpush1.bf16.xpose.msra.mxu0 0
          %498 = vmatprep.subr.bf16.mxu0 0
          %499 = vmatpush1.bf16.xpose.msra.mxu0 0
          %500 = vmatprep.subr.bf16.mxu0 0
          %501 = vmatpush1.bf16.xpose.msra.mxu0 0
          %502 = vmatprep.subr.bf16.mxu0 0
          %503 = vmatpush1.bf16.xpose.msra.mxu0 0
          %504 = vmatprep.subr.bf16.mxu0 0
          %505 = vmatpush1.bf16.xpose.msra.mxu0 0
          %506 = vmatprep.subr.bf16.mxu0 0
          %507 = vmatpush1.bf16.xpose.msra.mxu0 0
          %508 = vmatprep.subr.bf16.mxu0 0
          %509 = vmatpush1.bf16.xpose.msra.mxu0 0
          %510 = vmatprep.subr.bf16.mxu0 0
          %511 = vmatpush1.bf16.xpose.msra.mxu0 0
          %512 = vmatprep.mubr.bf16.mxu0 %v477
          %513 = vmatmul.mubr.bf16.gmra.mrb[0].mxu0 %v476
          %v514 = vpop.f32.mrb[0].mxu0
          %v515 = vadd.f32 0.0, %v514
          %v516 = vpop.f32.mrb[0].mxu0
          %v517 = vpop.f32.mrb[0].mxu0
          %v518 = vadd.f32 0.0, %v517
          %v519 = vpop.f32.mrb[0].mxu0
          %520 = vdwg.mxu0
          %v521 = vmul.f32 %v515, %v163
          %v522 = vmul.f32 %v518, %v164
          %v523 = vlaneseq
          %v524 = vand.u32 %v523, 127
          %vm525 = vcmp.lt.s32.totalorder %v524, 32
          %v526 = vsel %vm525, %v521, -inf
          %v527 = vsel %vm525, %v522, -inf
          %528 = vmax.xlane.f32.xlu0 %v526
          %v529 = vpop.xlane.xlu0 %528
          %530 = vmax.xlane.f32.xlu0 %v527
          %v531 = vpop.xlane.xlu0 %530
          %v532 = vsub.f32 %v526, %v529
          %v533 = vsub.f32 %v527, %v531
          %v534 = vmul.f32 %v532, 1.442695
          %v535 = vpow.pop %v534
          %v536 = vmul.f32 %v533, 1.442695
          %v537 = vpow.pop %v536
          %538 = vadd.xlane.f32.xlu0 %v535
          %v539 = vpop.xlane.xlu0 %538
          %540 = vadd.xlane.f32.xlu0 %v537
          %v541 = vpop.xlane.xlu0 %540
          %v542 = vlog2.pop %v539
          %v543 = vmul.f32 %v542, 0.6931472
          %v544 = vlog2.pop %v541
          %v545 = vmul.f32 %v544, 0.6931472
          %v546 = vadd.f32 %v529, %v543
          %v547 = vadd.f32 %v531, %v545
          %v548 = vunpack.c.l.bf16 %v450
          %v549 = vunpack.c.l.bf16 %v451
          %v550 = vunpack.c.h.bf16 %v450
          %v551 = vunpack.c.h.bf16 %v451
          %v552 = vmul.f32 %v548, %v131
          %v553 = vmul.f32 %v549, %v132
          %v554 = vmul.f32 %v550, %v133
          %v555 = vmul.f32 %v551, %v134
          %v556 = vadd.f32 %v552, %v553
          %557 = vadd.xlane.f32.xlu0 %v556
          %v558 = vpop.xlane.xlu0 %557
          %v559 = vadd.f32 %v554, %v555
          %560 = vadd.xlane.f32.xlu0 %v559
          %v561 = vpop.xlane.xlu0 %560
          %v562 = vmul.f32 %v558, %v163
          %v563 = vmul.f32 %v561, %v164
          %v564 = vmul.f32 %v562, 2.0
          %v565 = vmul.f32 %v563, 2.0
          %v566 = vsub.f32 %v546, %v564
          %v567 = vsub.f32 %v547, %v565
          %v568 = vadd.f32 %v566, %v567
          %v569 = vrot.slane %v568, 4
          %v570 = vadd.f32 %v568, %v569
          %v571 = vrot.slane %v570, 2
          %v572 = vadd.f32 %v570, %v571
          %v573 = vrot.slane %v572, 1
          %v574 = vadd.f32 %v572, %v573
          %vm575 = vcmask 0
          %576 = vst.msk [vmem:[#allocation6] sm:$0x1] %vm575, %v574
          %vm577 = vcmask 122880
          %578 = vst.msk [vmem:[#allocation4] sm:$0x1] %vm577, -inf
          %579 = vst.msk [vmem:[#allocation5] sm:$0x1] %vm577, 0.0
        $region32: #{tpu_custom_call.1} parent=23 // pred_fallthru
          _
        %v580 = vld [vmem:[#allocation3] sm:$0xff]
        %v581 = vld [vmem:[#allocation3 + $0x8] sm:$0xff]
        %v586 = vunpack.c.l.b16 %v127
        %v587 = vunpack.c.h.b16 %v127
        %v588 = vunpack.c.l.b16 %v128
        %v589 = vunpack.c.h.b16 %v128
        %v590 = vunpack.c.l.b16 %v129
        %v591 = vunpack.c.h.b16 %v129
        %v592 = vunpack.c.l.b16 %v130
        %v593 = vunpack.c.h.b16 %v130
        %v594 = vpack.c.b16 %v588, %v586
        %v595 = vpack.c.b16 %v589, %v587
        %v596 = vpack.c.b16 %v592, %v590
        %v597 = vpack.c.b16 %v593, %v591
        %602 = vmatprep.subr.bf16.mxu0 %v581
        %603 = vmatpush1.bf16.xpose.msra.mxu0 %v580
        %604 = vmatprep.subr.bf16.mxu0 0
        %605 = vmatpush1.bf16.xpose.msra.mxu0 0
        %606 = vmatprep.subr.bf16.mxu0 0
        %607 = vmatpush1.bf16.xpose.msra.mxu0 0
        %608 = vmatprep.subr.bf16.mxu0 0
        %609 = vmatpush1.bf16.xpose.msra.mxu0 0
        %610 = vmatprep.subr.bf16.mxu0 0
        %611 = vmatpush1.bf16.xpose.msra.mxu0 0
        %612 = vmatprep.subr.bf16.mxu0 0
        %613 = vmatpush1.bf16.xpose.msra.mxu0 0
        %614 = vmatprep.subr.bf16.mxu0 0
        %615 = vmatpush1.bf16.xpose.msra.mxu0 0
        %616 = vmatprep.subr.bf16.mxu0 0
        %617 = vmatpush1.bf16.xpose.msra.mxu0 0
        %618 = vmatprep.subr.bf16.mxu0 0
        %619 = vmatpush1.bf16.xpose.msra.mxu0 0
        %620 = vmatprep.subr.bf16.mxu0 0
        %621 = vmatpush1.bf16.xpose.msra.mxu0 0
        %622 = vmatprep.subr.bf16.mxu0 0
        %623 = vmatpush1.bf16.xpose.msra.mxu0 0
        %624 = vmatprep.subr.bf16.mxu0 0
        %625 = vmatpush1.bf16.xpose.msra.mxu0 0
        %626 = vmatprep.subr.bf16.mxu0 0
        %627 = vmatpush1.bf16.xpose.msra.mxu0 0
        %628 = vmatprep.subr.bf16.mxu0 0
        %629 = vmatpush1.bf16.xpose.msra.mxu0 0
        %630 = vmatprep.subr.bf16.mxu0 0
        %631 = vmatpush1.bf16.xpose.msra.mxu0 0
        %632 = vmatprep.subr.bf16.mxu0 0
        %633 = vmatpush1.bf16.xpose.msra.mxu0 0
        %634 = vmatprep.mubr.bf16.mxu0 %v595
        %635 = vmatmul.mubr.bf16.gmra.mrb[0].mxu0 %v594
        %v636 = vpop.f32.mrb[0].mxu0
        %v637 = vadd.f32 0.0, %v636
        %v638 = vpop.f32.mrb[0].mxu0
        %v639 = vpop.f32.mrb[0].mxu0
        %v640 = vadd.f32 0.0, %v639
        %v641 = vpop.f32.mrb[0].mxu0
        %642 = vmatprep.mubr.bf16.mxu0 %v597
        %643 = vmatmul.mubr.bf16.gmra.mrb[0].mxu0 %v596
        %v644 = vpop.f32.mrb[0].mxu0
        %v645 = vadd.f32 0.0, %v644
        %v646 = vpop.f32.mrb[0].mxu0
        %v647 = vpop.f32.mrb[0].mxu0
        %v648 = vadd.f32 0.0, %v647
        %v649 = vpop.f32.mrb[0].mxu0
        %650 = vdwg.mxu0
        %v651 = vmul.f32 %v637, %v163
        %v652 = vmul.f32 %v640, %v164
        %v653 = vmul.f32 %v645, %v165
        %v654 = vmul.f32 %v648, %v166
        %v655 = vld [vmem:[#allocation4] sm:$0x1]
        %vm656 = vcmask 130048
        %v657 = vsel %vm656, %v651, -inf
        %v658 = vsel %vm656, %v652, -inf
        %v659 = vsel %vm656, %v653, -inf
        %v660 = vsel %vm656, %v654, -inf
        %v661 = vmax.f32 %v657, %v658
        %v662 = vmax.f32 %v659, %v660
        %v663 = vmax.f32 %v661, %v662
        %v664 = vrot.slane %v663, 4
        %v665 = vmax.f32 %v663, %v664
        %v666 = vrot.slane %v665, 2
        %v667 = vmax.f32 %v665, %v666
        %v668 = vrot.slane %v667, 1
        %v669 = vmax.f32 %v667, %v668
        %v670 = vmax.f32 %v655, %v669
        %v671 = vld [vmem:[#allocation5] sm:$0x1]
        %v672 = vsub.f32 %v655, %v670
        %v673 = vmul.f32 %v672, 1.442695
        %v674 = vpow.pop %v673
        %v675 = vmul.f32 %v671, %v674
        %v677 = vlaneseq
        %v678 = vshrl.u32 %v677, 7
        %v679 = vsub.s32 0, %v678
        %v680 = vrot.slane %v670, %v679
        %v682 = vsub.f32 %v651, %v680
        %v683 = vsub.f32 %v652, %v680
        %v684 = vsub.f32 %v653, %v680
        %v685 = vsub.f32 %v654, %v680
        %v686 = vmul.f32 %v682, 1.442695
        %v687 = vpow.pop %v686
        %v688 = vmul.f32 %v683, 1.442695
        %v689 = vpow.pop %v688
        %v690 = vmul.f32 %v684, 1.442695
        %v691 = vpow.pop %v690
        %v692 = vmul.f32 %v685, 1.442695
        %v693 = vpow.pop %v692
        %v694 = vsel %vm656, %v687, 0.0
        %v695 = vsel %vm656, %v689, 0.0
        %v696 = vadd.f32 %v694, %v695
        %v697 = vsel %vm656, %v691, 0.0
        %v698 = vadd.f32 %v696, %v697
        %v699 = vsel %vm656, %v693, 0.0
        %v700 = vadd.f32 %v698, %v699
        %v701 = vrot.slane %v700, 4
        %v702 = vadd.f32 %v700, %v701
        %v703 = vrot.slane %v702, 2
        %v704 = vadd.f32 %v702, %v703
        %v705 = vrot.slane %v704, 1
        %v706 = vadd.f32 %v704, %v705
        %v707 = vadd.f32 %v675, %v706
        %vm708 = vcmask 122880
        %709 = vst.msk [vmem:[#allocation5] sm:$0x1] %vm708, %v707
        %710 = vst.msk [vmem:[#allocation4] sm:$0x1] %vm708, %v670
        %p711 = scmp.eq.s32.totalorder %s17, 1
        // Predicated region
        $region34: #{tpu_custom_call.1} parent=23 // pred_check
          %p712 = pneg %p711
        $region35: #{tpu_custom_call.1} parent=23 // pred_check_branch
          %714 = sbr.rel (%p712) target = $region37
        $region36: #{tpu_custom_call.1} parent=23 // pred_region
          %v715 = vld [vmem:[#allocation4] sm:$0x1]
          %v716 = vld [vmem:[#allocation5] sm:$0x1]
          %v717 = vlog2.pop %v716
          %v718 = vmul.f32 %v717, 0.6931472
          %v719 = vadd.f32 %v715, %v718
          %v720 = vsel %vm708, %v719, 0.0
          %721 = vadd.xlane.f32.xlu0 %v720
          %v722 = vpop.xlane.xlu0 %721
          %v723 = vld [vmem:[#allocation6] sm:$0x1]
          %v724 = vadd.f32 %v722, %v723
          %v725 = vrcp.pop 32.0
          %v726 = vmul.f32 %v724, %v725
          %vm727 = vcmask 0
          %728 = vst.msk [vmem:[#allocation10] sm:$0x1] %vm727, %v726
        $region37: #{tpu_custom_call.1} parent=23 // pred_fallthru
          _
        // Predicated region
        $region38: #{tpu_custom_call.1} parent=23 // pred_check
          %p729 = pneg %p56
        $region39: #{tpu_custom_call.1} parent=23 // pred_check_branch
          %731 = sbr.rel (%p729) target = $region41
        $region40: #{tpu_custom_call.1} parent=23 // pred_region
          %s733 = ssub.s32 16, 16
          %734 = vsyncadd [#allocation9], %s733
          %s736 = sshll.u32 [#allocation10], 4
          %s737 = int_to_ptr.vmem [resolvable:$true] %s736
          %739 = dma.vmem_to_hbm [thread:$0]  %s737, 16, %s2, [#allocation9]
        $region41: #{tpu_custom_call.1} parent=23 // pred_fallthru
          _
        // Predicated region
        $region42: #{tpu_custom_call.1} parent=23 // pred_check
          %p740 = pneg %p56
        $region43: #{tpu_custom_call.1} parent=23 // pred_check_branch
          %742 = sbr.rel (%p740) target = $region45
        $region44: #{tpu_custom_call.1} parent=23 // pred_region
          %743 = dma.done [#allocation9], 16
        $region45: #{tpu_custom_call.1} parent=23 // pred_fallthru
          _
      $region24: #{tpu_custom_call.1} parent=5 // pred_fallthru
        _
      %p744 = scmp.le.s32.totalorder 2, %s12
      // Predicated region
      $region46: #{tpu_custom_call.1} parent=5 // pred_check
        %p745 = pneg %p744
      $region47: #{tpu_custom_call.1} parent=5 // pred_check_branch
        %747 = sbr.rel (%p745) target = $region49
      $region48: #{tpu_custom_call.1} parent=5 // pred_region
        %s748 = ssub.s32 %s12, 2
      $region49: #{tpu_custom_call.1} parent=5 // pred_fallthru
        _
    $region6: #{tpu_custom_call.1} parent=1 // loop_footer
      %s16 = sadd.s32 1, %s12
    $region7: #{tpu_custom_call.1} parent=1 // loop_footer_branch
      %11 = sbr.rel target = $region3
    $region8: #{tpu_custom_call.1} parent=1 // loop_exit
      _
    %749 = vsyncpa [#allocation8], 1
    %s750 = scalar_lea.sflag [#allocation8], 1
    %751 = vsyncpa %s750, 1
    %752 = vsyncpa [#allocation9], 1
    %s753 = scalar_lea.sflag [#allocation9], 1
    %754 = vsyncpa %s753, 1

</llo_original>
